<compile_context>
chip_gen: v5e
topology: v5e:2x2
jax: 0.10.0
libtpu: 0.0.40
codegen_flags: <defaults>
</compile_context>

<pallas_src>
import functools
import math

import jax
import jax.numpy as jnp
from jax.experimental import pallas as pl
from jax.experimental.pallas import tpu as pltpu


def _cdiv(a, b):
    return (a + b - 1) // b


def _round_up(v, m):
    return ((v + m - 1) // m) * m


def _layernorm_epilogue(y, g_ref, beta_ref, eps, out_dtype):
    """y: (tm, hidden) f32. One-pass mean / var, then scale+shift."""
    inv_n = jnp.float32(1.0 / y.shape[-1])
    mean = jnp.sum(y, axis=-1, keepdims=True) * inv_n
    mean_sq = jnp.sum(y * y, axis=-1, keepdims=True) * inv_n
    var = jnp.maximum(mean_sq - mean * mean, 0.0)
    y_norm = (y - mean) * jax.lax.rsqrt(var + eps)
    out = y_norm * g_ref[...].astype(jnp.float32) + beta_ref[...].astype(jnp.float32)
    return out.astype(out_dtype)


def _fused_single_k_kernel(x_ref, w_ref, b_ref, res_ref, g_ref, beta_ref, o_ref, *, eps):
    # x_ref: (tm, K); w_ref: (N, K) -- PyTorch Linear layout; contract dim 1 of both.
    y = jax.lax.dot_general(
        x_ref[...], w_ref[...],
        dimension_numbers=(((1,), (1,)), ((), ())),
        preferred_element_type=jnp.float32,
    )
    # TODO(synk): dropout has p=0.0 in the module (identity); a training-mode dropout
    # would use pltpu.prng_seed / pltpu.stateful_bernoulli here.
    y = y + b_ref[...].astype(jnp.float32) + res_ref[...].astype(jnp.float32)
    o_ref[...] = _layernorm_epilogue(y, g_ref, beta_ref, eps, o_ref.dtype)


def _fused_tiled_k_kernel(x_ref, w_ref, b_ref, res_ref, g_ref, beta_ref, o_ref,
                          acc_ref, *, eps):
    k = pl.program_id(1)

    @pl.when(k == 0)
    def _():
        # Seed the accumulator with bias + residual so the last step only does LayerNorm.
        acc_ref[...] = (b_ref[...].astype(jnp.float32)
                        + res_ref[...].astype(jnp.float32))

    acc_ref[...] += jax.lax.dot_general(
        x_ref[...], w_ref[...],
        dimension_numbers=(((1,), (1,)), ((), ())),
        preferred_element_type=jnp.float32,
    )

    @pl.when(k == pl.num_programs(1) - 1)
    def _():
        o_ref[...] = _layernorm_epilogue(acc_ref[...], g_ref, beta_ref, eps, o_ref.dtype)


def _estimate_vmem_bytes(tm, tk, hidden, in_isz, out_isz, tiled):
    x = 2 * tm * tk * in_isz            # double-buffered activation tile
    w = 2 * hidden * tk * in_isz        # weight tile (conservatively 2 buffers)
    res = 2 * tm * hidden * in_isz      # residual tile
    out = 2 * tm * hidden * out_isz     # output tile
    vecs = 6 * 2 * hidden * 4           # bias / gamma / beta
    acc = tm * hidden * 4 if tiled else 0
    epilogue = 2 * tm * hidden * 4      # f32 temporaries for the LayerNorm math
    return x + w + res + out + vecs + acc + epilogue


def bert_att_output(hidden_states, input_tensor, weight, bias, gamma, beta,
                    *, eps=1e-8, block_rows=512, block_k=None):
    """Fused dense(hidden->hidden) + bias + residual + LayerNorm.

    `weight` is PyTorch-Linear style (out_features, in_features) and is consumed
    in that layout (no transpose).
    """
    orig_shape = hidden_states.shape
    hidden = orig_shape[-1]
    x = hidden_states.reshape(-1, hidden)
    res = input_tensor.reshape(-1, hidden)
    rows = x.shape[0]

    b2 = bias.reshape(1, hidden)
    g2 = gamma.reshape(1, hidden)
    beta2 = beta.reshape(1, hidden)

    in_isz = jnp.dtype(x.dtype).itemsize
    out_isz = jnp.dtype(hidden_states.dtype).itemsize

    # VMEM budget (v7x has only 64 MiB per TensorCore; v5e/v6e have 128 MiB).
    try:
        vmem_cap = int(pltpu.get_tpu_info().vmem_capacity_bytes)
    except Exception:
        vmem_cap = 64 * 1024 * 1024
    budget = int(0.80 * vmem_cap)

    # Row tiling: large tiles, but at least 2 row tiles when possible so the
    # 'parallel' row axis can shard across both TensorCores on v7x.
    if rows <= 8:
        tm = rows                         # tiny input: full-extent row block
    else:
        tm = min(block_rows, _round_up(_cdiv(rows, 2), 8))

    # K tiling: prefer a single K step (VMEM-resident weight, no accumulator).
    if (block_k is not None and block_k < hidden
            and hidden % block_k == 0 and block_k % 128 == 0):
        tk = block_k                      # explicit override (mainly for testing)
    elif _estimate_vmem_bytes(tm, hidden, hidden, in_isz, out_isz, tiled=False) <= budget:
        tk = hidden
    else:
        tk = hidden
        for cand in (1024, 768, 512, 256, 128):   # prefer 256-aligned tiles (v6e MXU)
            if hidden % cand == 0:
                tk = cand
                break

    tiled = tk < hidden

    # Shrink the row tile if the footprint still exceeds the budget.
    while tm > 8 and _estimate_vmem_bytes(tm, tk, hidden, in_isz, out_isz, tiled) > budget:
        tm = max(8, _round_up(tm // 2, 8))

    grid_m = _cdiv(rows, tm)
    footprint = _estimate_vmem_bytes(tm, tk, hidden, in_isz, out_isz, tiled)
    vmem_limit = int(min(int(0.9 * vmem_cap),
                         max(32 * 1024 * 1024, footprint + 16 * 1024 * 1024)))

    if not tiled:
        kernel = functools.partial(_fused_single_k_kernel, eps=eps)
        grid = (grid_m,)
        in_specs = [
            pl.BlockSpec((tm, hidden), lambda i: (i, 0)),        # hidden_states
            pl.BlockSpec((hidden, hidden), lambda i: (0, 0)),    # weight (N, K), resident
            pl.BlockSpec((1, hidden), lambda i: (0, 0)),         # bias
            pl.BlockSpec((tm, hidden), lambda i: (i, 0)),        # residual
            pl.BlockSpec((1, hidden), lambda i: (0, 0)),         # gamma
            pl.BlockSpec((1, hidden), lambda i: (0, 0)),         # beta
        ]
        out_specs = pl.BlockSpec((tm, hidden), lambda i: (i, 0))
        scratch = []
        dim_sem = ("parallel",)
    else:
        grid_k = hidden // tk
        kernel = functools.partial(_fused_tiled_k_kernel, eps=eps)
        grid = (grid_m, grid_k)
        in_specs = [
            pl.BlockSpec((tm, tk), lambda i, k: (i, k)),         # hidden_states
            pl.BlockSpec((hidden, tk), lambda i, k: (0, k)),     # weight (N, K) K-slab
            pl.BlockSpec((1, hidden), lambda i, k: (0, 0)),      # bias
            pl.BlockSpec((tm, hidden), lambda i, k: (i, 0)),     # residual
            pl.BlockSpec((1, hidden), lambda i, k: (0, 0)),      # gamma
            pl.BlockSpec((1, hidden), lambda i, k: (0, 0)),      # beta
        ]
        out_specs = pl.BlockSpec((tm, hidden), lambda i, k: (i, 0))
        scratch = [pltpu.VMEM((tm, hidden), jnp.float32)]
        dim_sem = ("parallel", "arbitrary")

    out = pl.pallas_call(
        kernel,
        out_shape=jax.ShapeDtypeStruct((rows, hidden), hidden_states.dtype),
        grid_spec=pltpu.PrefetchScalarGridSpec(
            num_scalar_prefetch=0,
            grid=grid,
            in_specs=in_specs,
            out_specs=out_specs,
            scratch_shapes=scratch,
        ),
        compiler_params=pltpu.CompilerParams(
            dimension_semantics=dim_sem,
            vmem_limit_bytes=vmem_limit,
        ),
    )(x, weight, b2, res, g2, beta2)

    return out.reshape(orig_shape)


def bert_att_output_ref(hidden_states, input_tensor, weight, bias, gamma, beta,
                        *, eps=1e-8):
    y = jnp.einsum("...k,nk->...n", hidden_states.astype(jnp.float32),
                   weight.astype(jnp.float32),
                   precision=jax.lax.Precision.HIGHEST) + bias.astype(jnp.float32)
    z = y + input_tensor.astype(jnp.float32)
    mean = jnp.mean(z, axis=-1, keepdims=True)
    var = jnp.mean(jnp.square(z - mean), axis=-1, keepdims=True)
    return (z - mean) * jax.lax.rsqrt(var + eps) * gamma + beta


if __name__ == "__main__":
    key = jax.random.PRNGKey(0)
    batch, seq, hidden = 2, 8, 256   # small, lane-dense (128-multiple) test shape
    k1, k2, k3, k4, k5, k6 = jax.random.split(key, 6)

    hidden_states = jax.random.normal(k1, (batch, seq, hidden), dtype=jnp.float32)
    input_tensor = jax.random.normal(k2, (batch, seq, hidden), dtype=jnp.float32)
    weight = jax.random.normal(k3, (hidden, hidden), dtype=jnp.float32) / math.sqrt(hidden)
    bias = 0.1 * jax.random.normal(k4, (hidden,), dtype=jnp.float32)
    gamma = 1.0 + 0.1 * jax.random.normal(k5, (hidden,), dtype=jnp.float32)
    beta = 0.1 * jax.random.normal(k6, (hidden,), dtype=jnp.float32)

    y_ref = bert_att_output_ref(hidden_states, input_tensor, weight, bias, gamma, beta,
                                eps=1e-8)

    # Default path: single K step, VMEM-resident weight, no accumulator scratch.
    y = bert_att_output(hidden_states, input_tensor, weight, bias, gamma, beta, eps=1e-8)
    jax.block_until_ready(y)
    assert y.shape == hidden_states.shape and y.dtype == hidden_states.dtype
    # Native MXU precision (no f32 upcast / HIGHEST) => looser tolerance vs f32 reference.
    err = float(jnp.max(jnp.abs(y - y_ref)))
    assert jnp.allclose(y, y_ref, atol=4e-2, rtol=4e-2), f"single-K mismatch: {err}"

    # Also exercise the K-tiled fallback path (accumulator seeded with bias+residual).
    y2 = bert_att_output(hidden_states, input_tensor, weight, bias, gamma, beta,
                         eps=1e-8, block_k=128)
    jax.block_until_ready(y2)
    err2 = float(jnp.max(jnp.abs(y2 - y_ref)))
    assert jnp.allclose(y2, y_ref, atol=4e-2, rtol=4e-2), f"tiled-K mismatch: {err2}"

    print("KERNEL_OK")
</pallas_src>

<mosaic_0001>
module attributes {stable_mosaic.version = 11 : i64} {
  func.func @_fused_single_k_kernel(%arg0: i32, %arg1: memref<8x256xf32, #tpu.memory_space<vmem>>, %arg2: memref<256x256xf32, #tpu.memory_space<vmem>>, %arg3: memref<1x256xf32, #tpu.memory_space<vmem>>, %arg4: memref<8x256xf32, #tpu.memory_space<vmem>>, %arg5: memref<1x256xf32, #tpu.memory_space<vmem>>, %arg6: memref<1x256xf32, #tpu.memory_space<vmem>>, %arg7: memref<8x256xf32, #tpu.memory_space<vmem>>) attributes {dimension_semantics = [#tpu.dimension_semantics<parallel>], iteration_bounds = array<i64: 2>, scalar_prefetch = 0 : i64, scratch_operands = 0 : i64, tpu.core_type = #tpu.core_type<tc>, window_params = [{transform_indices = @transform_0, window_bounds = array<i64: 8, 256>}, {pipeline_mode = #tpu.pipeline_mode<synchronous>, transform_indices = @transform_1, window_bounds = array<i64: 256, 256>}, {pipeline_mode = #tpu.pipeline_mode<synchronous>, transform_indices = @transform_2, window_bounds = array<i64: 1, 256>}, {transform_indices = @transform_3, window_bounds = array<i64: 8, 256>}, {pipeline_mode = #tpu.pipeline_mode<synchronous>, transform_indices = @transform_4, window_bounds = array<i64: 1, 256>}, {pipeline_mode = #tpu.pipeline_mode<synchronous>, transform_indices = @transform_5, window_bounds = array<i64: 1, 256>}, {transform_indices = @transform_6, window_bounds = array<i64: 8, 256>}]} {
    %c0 = arith.constant 0 : index
    %c0_0 = arith.constant 0 : index
    %0 = vector.load %arg1[%c0, %c0_0] : memref<8x256xf32, #tpu.memory_space<vmem>>, vector<8x256xf32>
    %c0_1 = arith.constant 0 : index
    %c0_2 = arith.constant 0 : index
    %1 = vector.load %arg2[%c0_1, %c0_2] : memref<256x256xf32, #tpu.memory_space<vmem>>, vector<256x256xf32>
    %cst = arith.constant dense<0.000000e+00> : vector<8x256xf32>
    %2 = tpu.matmul %0, %1, %cst {dimension_numbers = #tpu.dot_dimension_numbers<[1], [1], [0], [0], [0, 0, 1, 0], [], []>} : vector<8x256xf32>, vector<256x256xf32>, vector<8x256xf32> -> vector<8x256xf32>
    %c0_3 = arith.constant 0 : index
    %c0_4 = arith.constant 0 : index
    %3 = vector.load %arg3[%c0_3, %c0_4] : memref<1x256xf32, #tpu.memory_space<vmem>>, vector<1x256xf32>
    %4 = vector.broadcast %3 : vector<1x256xf32> to vector<8x256xf32>
    %5 = arith.addf %2, %4 : vector<8x256xf32>
    %c0_5 = arith.constant 0 : index
    %c0_6 = arith.constant 0 : index
    %6 = vector.load %arg4[%c0_5, %c0_6] : memref<8x256xf32, #tpu.memory_space<vmem>>, vector<8x256xf32>
    %7 = arith.addf %5, %6 : vector<8x256xf32>
    %cst_7 = arith.constant dense<0.000000e+00> : vector<8xf32>
    %8 = vector.multi_reduction <add>, %7, %cst_7 [1] : vector<8x256xf32> to vector<8xf32>
    %9 = vector.shape_cast %8 : vector<8xf32> to vector<8x1xf32>
    %cst_8 = arith.constant 3.906250e-03 : f32
    %10 = vector.broadcast %cst_8 : f32 to vector<8x1xf32>
    %11 = arith.mulf %9, %10 : vector<8x1xf32>
    %12 = arith.mulf %7, %7 : vector<8x256xf32>
    %cst_9 = arith.constant dense<0.000000e+00> : vector<8xf32>
    %13 = vector.multi_reduction <add>, %12, %cst_9 [1] : vector<8x256xf32> to vector<8xf32>
    %14 = vector.shape_cast %13 : vector<8xf32> to vector<8x1xf32>
    %cst_10 = arith.constant 3.906250e-03 : f32
    %15 = vector.broadcast %cst_10 : f32 to vector<8x1xf32>
    %16 = arith.mulf %14, %15 : vector<8x1xf32>
    %17 = arith.mulf %11, %11 : vector<8x1xf32>
    %18 = arith.subf %16, %17 : vector<8x1xf32>
    %cst_11 = arith.constant 0.000000e+00 : f32
    %19 = vector.broadcast %cst_11 : f32 to vector<8x1xf32>
    %20 = arith.maximumf %18, %19 : vector<8x1xf32>
    %21 = vector.broadcast %11 : vector<8x1xf32> to vector<8x256xf32>
    %22 = arith.subf %7, %21 : vector<8x256xf32>
    %cst_12 = arith.constant 9.99999993E-9 : f32
    %23 = vector.broadcast %cst_12 : f32 to vector<8x1xf32>
    %24 = arith.addf %20, %23 : vector<8x1xf32>
    %25 = math.rsqrt %24 : vector<8x1xf32>
    %26 = vector.broadcast %25 : vector<8x1xf32> to vector<8x256xf32>
    %27 = arith.mulf %22, %26 : vector<8x256xf32>
    %c0_13 = arith.constant 0 : index
    %c0_14 = arith.constant 0 : index
    %28 = vector.load %arg5[%c0_13, %c0_14] : memref<1x256xf32, #tpu.memory_space<vmem>>, vector<1x256xf32>
    %29 = vector.broadcast %28 : vector<1x256xf32> to vector<8x256xf32>
    %30 = arith.mulf %27, %29 : vector<8x256xf32>
    %c0_15 = arith.constant 0 : index
    %c0_16 = arith.constant 0 : index
    %31 = vector.load %arg6[%c0_15, %c0_16] : memref<1x256xf32, #tpu.memory_space<vmem>>, vector<1x256xf32>
    %32 = vector.broadcast %31 : vector<1x256xf32> to vector<8x256xf32>
    %33 = arith.addf %30, %32 : vector<8x256xf32>
    %c0_17 = arith.constant 0 : index
    %c0_18 = arith.constant 0 : index
    %34 = vector.load %arg7[%c0_17, %c0_18] : memref<8x256xf32, #tpu.memory_space<vmem>>, vector<8x256xf32>
    tpu.vector_store %arg7[%c0_17, %c0_18], %33 {strides = array<i32>} : memref<8x256xf32, #tpu.memory_space<vmem>>, vector<8x256xf32>,
    return
  }
  func.func @transform_0(%arg0: i32) -> (i32, i32) {
    %c0_i32 = arith.constant 0 : i32
    %c0_i32_0 = arith.constant 0 : i32
    return %arg0, %c0_i32 : i32, i32
  }
  func.func @transform_1(%arg0: i32) -> (i32, i32) {
    %c0_i32 = arith.constant 0 : i32
    %c0_i32_0 = arith.constant 0 : i32
    %c0_i32_1 = arith.constant 0 : i32
    return %c0_i32, %c0_i32_0 : i32, i32
  }
  func.func @transform_2(%arg0: i32) -> (i32, i32) {
    %c0_i32 = arith.constant 0 : i32
    %c0_i32_0 = arith.constant 0 : i32
    %c0_i32_1 = arith.constant 0 : i32
    return %c0_i32, %c0_i32_0 : i32, i32
  }
  func.func @transform_3(%arg0: i32) -> (i32, i32) {
    %c0_i32 = arith.constant 0 : i32
    %c0_i32_0 = arith.constant 0 : i32
    return %arg0, %c0_i32 : i32, i32
  }
  func.func @transform_4(%arg0: i32) -> (i32, i32) {
    %c0_i32 = arith.constant 0 : i32
    %c0_i32_0 = arith.constant 0 : i32
    %c0_i32_1 = arith.constant 0 : i32
    return %c0_i32, %c0_i32_0 : i32, i32
  }
  func.func @transform_5(%arg0: i32) -> (i32, i32) {
    %c0_i32 = arith.constant 0 : i32
    %c0_i32_0 = arith.constant 0 : i32
    %c0_i32_1 = arith.constant 0 : i32
    return %c0_i32, %c0_i32_0 : i32, i32
  }
  func.func @transform_6(%arg0: i32) -> (i32, i32) {
    %c0_i32 = arith.constant 0 : i32
    %c0_i32_0 = arith.constant 0 : i32
    return %arg0, %c0_i32 : i32, i32
  }
}

</mosaic_0001>

<llo_original>
// kernel: tpu_custom_call.1
$region0: #{tpu_custom_call.1}
  #allocation0 [shape = 'u32[]', space=smem, size = 0x4, offset = 0x4, fixed_abs, tag = 'smem constant byte address 0x4 - core index']
  #allocation1 [shape = 'u32[72,128]{1,0:T(1,128)}', space=vmem, size = 0x9000, scoped, tag = 'internal scratch']
  %s0 = inlined_call_operand.hbm [shape: f32[16,256], index: 0, kind: input, shape index: {}]
  %s1 = inlined_call_operand.hbm [shape: f32[256,256], index: 1, kind: input, shape index: {}]
  %s2 = inlined_call_operand.hbm [shape: f32[1,256], index: 2, kind: input, shape index: {}]
  %s3 = inlined_call_operand.hbm [shape: f32[16,256], index: 3, kind: input, shape index: {}]
  %s4 = inlined_call_operand.vmem [shape: f32[1,256], index: 4, kind: input, shape index: {}]
  %s5 = inlined_call_operand.vmem [shape: f32[1,256], index: 5, kind: input, shape index: {}]
  %s6 = inlined_call_operand.hbm [shape: f32[16,256], index: 6, kind: output, shape index: {}]
  %s7 = sld [smem:[#allocation0]]
  $region73: #{tpu_custom_call.1} parent=0
    _
  %s9 = ssub.s32 1, %s7
  %s10 = scalar_select 0, %s9, %s7
  $region1: #{tpu_custom_call.1} parent=0
    #allocation2 [shape = 'u8[16384]{0}', space=vmem, size = 0x4000, scoped, tag = 'input window, operand 0']
    #allocation3 [shape = 's32[2]{0}', space=sflag, size = 0x8, scoped, tag = 'scoped memory for tpu_custom_call.1']
    #allocation4 [shape = 's32[2]{0}', space=sflag, size = 0x8, scoped, tag = 'scoped memory for tpu_custom_call.1']
    #allocation5 [shape = 'u8[262144]{0}', space=vmem, size = 0x40000, scoped, tag = 'input window, operand 1, single buffered']
    #allocation6 [shape = 's32[1]{0}', space=sflag, size = 0x4, scoped, tag = 'scoped memory for tpu_custom_call.1']
    #allocation7 [shape = 'u8[1024]{0}', space=vmem, size = 0x400, scoped, tag = 'input window, operand 2, single buffered']
    #allocation8 [shape = 'u8[16384]{0}', space=vmem, size = 0x4000, scoped, tag = 'input window, operand 3']
    #allocation9 [shape = 's32[2]{0}', space=sflag, size = 0x8, scoped, tag = 'scoped memory for tpu_custom_call.1']
    #allocation10 [shape = 'u8[16384]{0}', space=vmem, size = 0x4000, scoped, tag = 'output window, operand 0']
    %11 = vsyncpa [#allocation3], 0
    %s12 = scalar_lea.sflag [#allocation3], 1
    %13 = vsyncpa %s12, 0
    %14 = vsyncpa [#allocation6], 0
    %15 = vsyncpa [#allocation9], 0
    %s16 = scalar_lea.sflag [#allocation9], 1
    %17 = vsyncpa %s16, 0
    %18 = vsyncpa [#allocation4], 0
    %s19 = scalar_lea.sflag [#allocation4], 1
    %20 = vsyncpa %s19, 0
    loop: start=0, step=1, limit=4
    $region2: #{tpu_custom_call.1} parent=1 // loop_pre_header
      _
    $region3: #{tpu_custom_call.1} parent=1 // loop_header
      %s22 = sphi 0, %s26
      %p23 = scmp.ge.s32.totalorder %s22, 4
      %s32 = sphi 0, %s34
      %s35 = sphi 0, %s32
      %s36 = sphi 0, %s35
      %s52 = sphi 0, %s36
      %s56 = sphi 0, %s56
      %s58 = sphi 0, %s56
      %s59 = sphi 0, %s58
      %s73 = sphi 0, %s59
      %s77 = sphi 0, %s77
      %s79 = sphi 0, %s77
      %s80 = sphi 0, %s79
      %s94 = sphi 0, %s80
      %s100 = sphi 0, %s102
      %s103 = sphi 0, %s100
      %s104 = sphi 0, %s103
      %s120 = sphi 0, %s104
      %s124 = sphi 0, %s124
      %s126 = sphi 0, %s124
      %s127 = sphi 0, %s126
      %s141 = sphi 0, %s127
      %s145 = sphi 0, %s145
      %s147 = sphi 0, %s145
      %s148 = sphi 0, %s147
      %s162 = sphi 0, %s148
      %s168 = sphi 0, %s170
      %s171 = sphi 0, %s168
      %s172 = sphi 0, %s171
      %s188 = sphi 0, %s172
    $region4: #{tpu_custom_call.1} parent=1 // loop_header_branch
      %25 = sbr.rel (%p23) target = $region8
    $region5: #{tpu_custom_call.1} parent=1 // loop_body
      %s27 = ssub.s32 %s22, 1
      %s28 = ssub.s32 %s22, 2
      %s29 = sadd.s32 %s22, 1
      %s30 = ssub.s32 %s22, %s29
      %p31 = scmp.eq.s32.totalorder %s30, 0
      %s33 = sadd.s32 %s32, 1
      %s34 = scalar_select %p31, %s32, %s33
      %p37 = pneg %p31
      %p38 = scmp.eq.s32.totalorder %s22, 1
      %p39 = por %p37, %p38
      %p40 = scmp.ne.s32.totalorder %s32, %s35
      %p41 = scmp.eq.s32.totalorder %s22, 0
      %p42 = por %p40, %p41
      %p43 = scmp.ne.s32.totalorder %s32, %s35
      %p44 = scmp.eq.s32.totalorder %s27, 1
      %p45 = por %p43, %p44
      %p46 = scmp.ne.s32.totalorder %s35, %s36
      %p47 = scmp.eq.s32.totalorder %s27, 0
      %p48 = por %p46, %p47
      %p49 = scmp.ne.s32.totalorder %s35, %s36
      %p50 = scmp.eq.s32.totalorder %s28, 1
      %p51 = por %p49, %p50
      %p53 = scmp.ne.s32.totalorder %s36, %s52
      %p54 = scmp.eq.s32.totalorder %s28, 0
      %p55 = por %p53, %p54
      %s57 = sadd.s32 %s56, 1
      %p60 = scmp.eq.s32.totalorder %s22, 1
      %p61 = scmp.ne.s32.totalorder %s56, %s58
      %p62 = scmp.eq.s32.totalorder %s22, 0
      %p63 = por %p61, %p62
      %p64 = scmp.ne.s32.totalorder %s56, %s58
      %p65 = scmp.eq.s32.totalorder %s27, 1
      %p66 = por %p64, %p65
      %p67 = scmp.ne.s32.totalorder %s58, %s59
      %p68 = scmp.eq.s32.totalorder %s27, 0
      %p69 = por %p67, %p68
      %p70 = scmp.ne.s32.totalorder %s58, %s59
      %p71 = scmp.eq.s32.totalorder %s28, 1
      %p72 = por %p70, %p71
      %p74 = scmp.ne.s32.totalorder %s59, %s73
      %p75 = scmp.eq.s32.totalorder %s28, 0
      %p76 = por %p74, %p75
      %s78 = sadd.s32 %s77, 1
      %p81 = scmp.eq.s32.totalorder %s22, 1
      %p82 = scmp.ne.s32.totalorder %s77, %s79
      %p83 = scmp.eq.s32.totalorder %s22, 0
      %p84 = por %p82, %p83
      %p85 = scmp.ne.s32.totalorder %s77, %s79
      %p86 = scmp.eq.s32.totalorder %s27, 1
      %p87 = por %p85, %p86
      %p88 = scmp.ne.s32.totalorder %s79, %s80
      %p89 = scmp.eq.s32.totalorder %s27, 0
      %p90 = por %p88, %p89
      %p91 = scmp.ne.s32.totalorder %s79, %s80
      %p92 = scmp.eq.s32.totalorder %s28, 1
      %p93 = por %p91, %p92
      %p95 = scmp.ne.s32.totalorder %s80, %s94
      %p96 = scmp.eq.s32.totalorder %s28, 0
      %p97 = por %p95, %p96
      %s98 = ssub.s32 %s22, %s29
      %p99 = scmp.eq.s32.totalorder %s98, 0
      %s101 = sadd.s32 %s100, 1
      %s102 = scalar_select %p99, %s100, %s101
      %p105 = pneg %p99
      %p106 = scmp.eq.s32.totalorder %s22, 1
      %p107 = por %p105, %p106
      %p108 = scmp.ne.s32.totalorder %s100, %s103
      %p109 = scmp.eq.s32.totalorder %s22, 0
      %p110 = por %p108, %p109
      %p111 = scmp.ne.s32.totalorder %s100, %s103
      %p112 = scmp.eq.s32.totalorder %s27, 1
      %p113 = por %p111, %p112
      %p114 = scmp.ne.s32.totalorder %s103, %s104
      %p115 = scmp.eq.s32.totalorder %s27, 0
      %p116 = por %p114, %p115
      %p117 = scmp.ne.s32.totalorder %s103, %s104
      %p118 = scmp.eq.s32.totalorder %s28, 1
      %p119 = por %p117, %p118
      %p121 = scmp.ne.s32.totalorder %s104, %s120
      %p122 = scmp.eq.s32.totalorder %s28, 0
      %p123 = por %p121, %p122
      %s125 = sadd.s32 %s124, 1
      %p128 = scmp.eq.s32.totalorder %s22, 1
      %p129 = scmp.ne.s32.totalorder %s124, %s126
      %p130 = scmp.eq.s32.totalorder %s22, 0
      %p131 = por %p129, %p130
      %p132 = scmp.ne.s32.totalorder %s124, %s126
      %p133 = scmp.eq.s32.totalorder %s27, 1
      %p134 = por %p132, %p133
      %p135 = scmp.ne.s32.totalorder %s126, %s127
      %p136 = scmp.eq.s32.totalorder %s27, 0
      %p137 = por %p135, %p136
      %p138 = scmp.ne.s32.totalorder %s126, %s127
      %p139 = scmp.eq.s32.totalorder %s28, 1
      %p140 = por %p138, %p139
      %p142 = scmp.ne.s32.totalorder %s127, %s141
      %p143 = scmp.eq.s32.totalorder %s28, 0
      %p144 = por %p142, %p143
      %s146 = sadd.s32 %s145, 1
      %p149 = scmp.eq.s32.totalorder %s22, 1
      %p150 = scmp.ne.s32.totalorder %s145, %s147
      %p151 = scmp.eq.s32.totalorder %s22, 0
      %p152 = por %p150, %p151
      %p153 = scmp.ne.s32.totalorder %s145, %s147
      %p154 = scmp.eq.s32.totalorder %s27, 1
      %p155 = por %p153, %p154
      %p156 = scmp.ne.s32.totalorder %s147, %s148
      %p157 = scmp.eq.s32.totalorder %s27, 0
      %p158 = por %p156, %p157
      %p159 = scmp.ne.s32.totalorder %s147, %s148
      %p160 = scmp.eq.s32.totalorder %s28, 1
      %p161 = por %p159, %p160
      %p163 = scmp.ne.s32.totalorder %s148, %s162
      %p164 = scmp.eq.s32.totalorder %s28, 0
      %p165 = por %p163, %p164
      %s166 = ssub.s32 %s22, %s29
      %p167 = scmp.eq.s32.totalorder %s166, 0
      %s169 = sadd.s32 %s168, 1
      %s170 = scalar_select %p167, %s168, %s169
      %p173 = pneg %p167
      %p174 = scmp.eq.s32.totalorder %s22, 1
      %p175 = por %p173, %p174
      %p176 = scmp.ne.s32.totalorder %s168, %s171
      %p177 = scmp.eq.s32.totalorder %s22, 0
      %p178 = por %p176, %p177
      %p179 = scmp.ne.s32.totalorder %s168, %s171
      %p180 = scmp.eq.s32.totalorder %s27, 1
      %p181 = por %p179, %p180
      %p182 = scmp.ne.s32.totalorder %s171, %s172
      %p183 = scmp.eq.s32.totalorder %s27, 0
      %p184 = por %p182, %p183
      %p185 = scmp.ne.s32.totalorder %s171, %s172
      %p186 = scmp.eq.s32.totalorder %s28, 1
      %p187 = por %p185, %p186
      %p189 = scmp.ne.s32.totalorder %s172, %s188
      %p190 = scmp.eq.s32.totalorder %s28, 0
      %p191 = por %p189, %p190
      %p192 = scmp.le.s32.totalorder 1, %s22
      %p193 = scmp.lt.s32.totalorder %s22, 3
      %p194 = pnand %p192, %p193
      %p195 = pneg %p194
      // Predicated region
      $region9: #{tpu_custom_call.1} parent=5 // pred_check
        _
      $region10: #{tpu_custom_call.1} parent=5 // pred_check_branch
        %197 = sbr.rel (%p194) target = $region12
      $region11: #{tpu_custom_call.1} parent=5 // pred_region
        %s198 = ssub.s32 %s22, 1
        // Predicated region
        $region13: #{tpu_custom_call.1} parent=11 // pred_check
          %p199 = pneg %p69
        $region14: #{tpu_custom_call.1} parent=11 // pred_check_branch
          %201 = sbr.rel (%p199) target = $region16
        $region15: #{tpu_custom_call.1} parent=11 // pred_region
          %203 = vsyncadd [#allocation6], 0
          %s204 = sshll.u32 %s1, 4
          %s205 = int_to_ptr.hbm [resolvable:$true] %s204
          %s206 = sshll.u32 [#allocation5], 4
          %s207 = int_to_ptr.vmem [resolvable:$true] %s206
          %212 = dma.hbm_to_vmem [thread:$0]  %s205, 8192, %s207, [#allocation6], 256, 256, 16
        $region16: #{tpu_custom_call.1} parent=11 // pred_fallthru
          _
        // Predicated region
        $region17: #{tpu_custom_call.1} parent=11 // pred_check
          %p213 = pneg %p90
        $region18: #{tpu_custom_call.1} parent=11 // pred_check_branch
          %215 = sbr.rel (%p213) target = $region20
        $region19: #{tpu_custom_call.1} parent=11 // pred_region
          %217 = vsyncadd [#allocation6], 0
          %s219 = sshll.u32 %s2, 4
          %s220 = int_to_ptr.hbm [resolvable:$true] %s219
          %s221 = sshll.u32 [#allocation7], 4
          %s222 = int_to_ptr.vmem [resolvable:$true] %s221
          %224 = dma.hbm_to_vmem [thread:$0]  %s220, 32, %s222, [#allocation6]
        $region20: #{tpu_custom_call.1} parent=11 // pred_fallthru
          _
        // Predicated region
        $region21: #{tpu_custom_call.1} parent=11 // pred_check
          %p225 = pneg %p137
        $region22: #{tpu_custom_call.1} parent=11 // pred_check_branch
          %227 = sbr.rel (%p225) target = $region24
        $region23: #{tpu_custom_call.1} parent=11 // pred_region
          _
        $region24: #{tpu_custom_call.1} parent=11 // pred_fallthru
          _
        // Predicated region
        $region25: #{tpu_custom_call.1} parent=11 // pred_check
          %p228 = pneg %p158
        $region26: #{tpu_custom_call.1} parent=11 // pred_check_branch
          %230 = sbr.rel (%p228) target = $region28
        $region27: #{tpu_custom_call.1} parent=11 // pred_region
          _
        $region28: #{tpu_custom_call.1} parent=11 // pred_fallthru
          _
      $region12: #{tpu_custom_call.1} parent=5 // pred_fallthru
        _
      %p231 = scmp.lt.s32.totalorder %s22, 2
      // Predicated region
      $region29: #{tpu_custom_call.1} parent=5 // pred_check
        %p232 = pneg %p231
      $region30: #{tpu_custom_call.1} parent=5 // pred_check_branch
        %234 = sbr.rel (%p232) target = $region32
      $region31: #{tpu_custom_call.1} parent=5 // pred_region
        // Predicated region
        $region33: #{tpu_custom_call.1} parent=31 // pred_check
          %p235 = pneg %p42
        $region34: #{tpu_custom_call.1} parent=31 // pred_check_branch
          %237 = sbr.rel (%p235) target = $region36
        $region35: #{tpu_custom_call.1} parent=31 // pred_region
          %s238 = sand.u32 %s32, 1
          %s239 = scalar_lea.sflag [#allocation3], %s238
          %s240 = sand.u32 %s32, 1
          %s241 = smul.addr %s240, 16
          %s242 = scalar_lea.vmem [#allocation2], %s241
          %244 = vsyncadd %s239, 0
          %s245 = smul.addr %s22, 2
          %s246 = smul.addr %s245, 8
          %s247 = scalar_lea.hbm %s0, %s246
          %s249 = sshll.u32 %s247, 4
          %s250 = int_to_ptr.hbm [resolvable:$true] %s249
          %s251 = sshll.u32 %s242, 4
          %s252 = int_to_ptr.vmem [resolvable:$true] %s251
          %254 = dma.hbm_to_vmem [thread:$0]  %s250, 256, %s252, %s239
        $region36: #{tpu_custom_call.1} parent=31 // pred_fallthru
          _
        // Predicated region
        $region37: #{tpu_custom_call.1} parent=31 // pred_check
          %p255 = pneg %p110
        $region38: #{tpu_custom_call.1} parent=31 // pred_check_branch
          %257 = sbr.rel (%p255) target = $region40
        $region39: #{tpu_custom_call.1} parent=31 // pred_region
          %s258 = sand.u32 %s100, 1
          %s259 = scalar_lea.sflag [#allocation9], %s258
          %s260 = sand.u32 %s100, 1
          %s261 = smul.addr %s260, 16
          %s262 = scalar_lea.vmem [#allocation8], %s261
          %264 = vsyncadd %s259, 0
          %s265 = smul.addr %s22, 2
          %s266 = smul.addr %s265, 8
          %s267 = scalar_lea.hbm %s3, %s266
          %s269 = sshll.u32 %s267, 4
          %s270 = int_to_ptr.hbm [resolvable:$true] %s269
          %s271 = sshll.u32 %s262, 4
          %s272 = int_to_ptr.vmem [resolvable:$true] %s271
          %274 = dma.hbm_to_vmem [thread:$0]  %s270, 256, %s272, %s259
        $region40: #{tpu_custom_call.1} parent=31 // pred_fallthru
          _
      $region32: #{tpu_custom_call.1} parent=5 // pred_fallthru
        _
      %p275 = scmp.le.s32.totalorder 1, %s22
      %p276 = scmp.lt.s32.totalorder %s22, 3
      %p277 = pnand %p275, %p276
      %p278 = pneg %p277
      // Predicated region
      $region41: #{tpu_custom_call.1} parent=5 // pred_check
        _
      $region42: #{tpu_custom_call.1} parent=5 // pred_check_branch
        %280 = sbr.rel (%p277) target = $region44
      $region43: #{tpu_custom_call.1} parent=5 // pred_region
        %s281 = ssub.s32 %s22, 1
        %s282 = sand.u32 %s35, 1
        %s283 = scalar_lea.sflag [#allocation3], %s282
        %s284 = sand.u32 %s35, 1
        %s285 = smul.addr %s284, 16
        %s286 = scalar_lea.vmem [#allocation2], %s285
        // Predicated region
        $region45: #{tpu_custom_call.1} parent=43 // pred_check
          %p287 = pneg %p48
        $region46: #{tpu_custom_call.1} parent=43 // pred_check_branch
          %289 = sbr.rel (%p287) target = $region48
        $region47: #{tpu_custom_call.1} parent=43 // pred_region
          %291 = dma.done %s283, 256
        $region48: #{tpu_custom_call.1} parent=43 // pred_fallthru
          _
        // Predicated region
        $region49: #{tpu_custom_call.1} parent=43 // pred_check
          %p292 = pneg %p69
        $region50: #{tpu_custom_call.1} parent=43 // pred_check_branch
          %294 = sbr.rel (%p292) target = $region52
        $region51: #{tpu_custom_call.1} parent=43 // pred_region
          %296 = dma.done [#allocation6], 8192
        $region52: #{tpu_custom_call.1} parent=43 // pred_fallthru
          _
        // Predicated region
        $region53: #{tpu_custom_call.1} parent=43 // pred_check
          %p297 = pneg %p90
        $region54: #{tpu_custom_call.1} parent=43 // pred_check_branch
          %299 = sbr.rel (%p297) target = $region56
        $region55: #{tpu_custom_call.1} parent=43 // pred_region
          %301 = dma.done [#allocation6], 32
        $region56: #{tpu_custom_call.1} parent=43 // pred_fallthru
          _
        %s302 = sand.u32 %s103, 1
        %s303 = scalar_lea.sflag [#allocation9], %s302
        %s304 = sand.u32 %s103, 1
        %s305 = smul.addr %s304, 16
        %s306 = scalar_lea.vmem [#allocation8], %s305
        // Predicated region
        $region57: #{tpu_custom_call.1} parent=43 // pred_check
          %p307 = pneg %p116
        $region58: #{tpu_custom_call.1} parent=43 // pred_check_branch
          %309 = sbr.rel (%p307) target = $region60
        $region59: #{tpu_custom_call.1} parent=43 // pred_region
          %311 = dma.done %s303, 256
        $region60: #{tpu_custom_call.1} parent=43 // pred_fallthru
          _
        %s312 = sand.u32 %s35, 1
        %s313 = scalar_lea.sflag [#allocation3], %s312
        %s314 = sand.u32 %s35, 1
        %s315 = smul.addr %s314, 16
        %s316 = scalar_lea.vmem [#allocation2], %s315
        %p317 = pneg %p48
        %p318 = pneg %p45
        %p319 = pneg %p69
        %p320 = pneg %p66
        %p321 = pneg %p90
        %p322 = pneg %p87
        %s323 = sand.u32 %s103, 1
        %s324 = scalar_lea.sflag [#allocation9], %s323
        %s325 = sand.u32 %s103, 1
        %s326 = smul.addr %s325, 16
        %s327 = scalar_lea.vmem [#allocation8], %s326
        %p328 = pneg %p116
        %p329 = pneg %p113
        %p330 = pneg %p137
        %p331 = pneg %p134
        %p332 = pneg %p158
        %p333 = pneg %p155
        %p334 = pneg %p184
        %p335 = pneg %p181
        %s336 = sand.u32 %s171, 1
        %s337 = scalar_lea.sflag [#allocation4], %s336
        %s338 = sand.u32 %s171, 1
        %s339 = smul.addr %s338, 16
        %s340 = scalar_lea.vmem [#allocation10], %s339
        %v341 = vld [vmem:[%s286] sm:$0xff]
        %v342 = vld [vmem:[%s286 + $0x8] sm:$0xff]
        %v343 = vld [vmem:[#allocation5] sm:$0xff]
        %v344 = vld [vmem:[#allocation5 + $0x8] sm:$0xff]
        %v345 = vld [vmem:[#allocation5 + $0x10] sm:$0xff]
        %v346 = vld [vmem:[#allocation5 + $0x18] sm:$0xff]
        %v347 = vld [vmem:[#allocation5 + $0x20] sm:$0xff]
        %v348 = vld [vmem:[#allocation5 + $0x28] sm:$0xff]
        %v349 = vld [vmem:[#allocation5 + $0x30] sm:$0xff]
        %v350 = vld [vmem:[#allocation5 + $0x38] sm:$0xff]
        %v351 = vld [vmem:[#allocation5 + $0x40] sm:$0xff]
        %v352 = vld [vmem:[#allocation5 + $0x48] sm:$0xff]
        %v353 = vld [vmem:[#allocation5 + $0x50] sm:$0xff]
        %v354 = vld [vmem:[#allocation5 + $0x58] sm:$0xff]
        %v355 = vld [vmem:[#allocation5 + $0x60] sm:$0xff]
        %v356 = vld [vmem:[#allocation5 + $0x68] sm:$0xff]
        %v357 = vld [vmem:[#allocation5 + $0x70] sm:$0xff]
        %v358 = vld [vmem:[#allocation5 + $0x78] sm:$0xff]
        %v359 = vld [vmem:[#allocation5 + $0x80] sm:$0xff]
        %v360 = vld [vmem:[#allocation5 + $0x88] sm:$0xff]
        %v361 = vld [vmem:[#allocation5 + $0x90] sm:$0xff]
        %v362 = vld [vmem:[#allocation5 + $0x98] sm:$0xff]
        %v363 = vld [vmem:[#allocation5 + $0xa0] sm:$0xff]
        %v364 = vld [vmem:[#allocation5 + $0xa8] sm:$0xff]
        %v365 = vld [vmem:[#allocation5 + $0xb0] sm:$0xff]
        %v366 = vld [vmem:[#allocation5 + $0xb8] sm:$0xff]
        %v367 = vld [vmem:[#allocation5 + $0xc0] sm:$0xff]
        %v368 = vld [vmem:[#allocation5 + $0xc8] sm:$0xff]
        %v369 = vld [vmem:[#allocation5 + $0xd0] sm:$0xff]
        %v370 = vld [vmem:[#allocation5 + $0xd8] sm:$0xff]
        %v371 = vld [vmem:[#allocation5 + $0xe0] sm:$0xff]
        %v372 = vld [vmem:[#allocation5 + $0xe8] sm:$0xff]
        %v373 = vld [vmem:[#allocation5 + $0xf0] sm:$0xff]
        %v374 = vld [vmem:[#allocation5 + $0xf8] sm:$0xff]
        %v375 = vld [vmem:[#allocation5 + $0x100] sm:$0xff]
        %v376 = vld [vmem:[#allocation5 + $0x108] sm:$0xff]
        %v377 = vld [vmem:[#allocation5 + $0x110] sm:$0xff]
        %v378 = vld [vmem:[#allocation5 + $0x118] sm:$0xff]
        %v379 = vld [vmem:[#allocation5 + $0x120] sm:$0xff]
        %v380 = vld [vmem:[#allocation5 + $0x128] sm:$0xff]
        %v381 = vld [vmem:[#allocation5 + $0x130] sm:$0xff]
        %v382 = vld [vmem:[#allocation5 + $0x138] sm:$0xff]
        %v383 = vld [vmem:[#allocation5 + $0x140] sm:$0xff]
        %v384 = vld [vmem:[#allocation5 + $0x148] sm:$0xff]
        %v385 = vld [vmem:[#allocation5 + $0x150] sm:$0xff]
        %v386 = vld [vmem:[#allocation5 + $0x158] sm:$0xff]
        %v387 = vld [vmem:[#allocation5 + $0x160] sm:$0xff]
        %v388 = vld [vmem:[#allocation5 + $0x168] sm:$0xff]
        %v389 = vld [vmem:[#allocation5 + $0x170] sm:$0xff]
        %v390 = vld [vmem:[#allocation5 + $0x178] sm:$0xff]
        %v391 = vld [vmem:[#allocation5 + $0x180] sm:$0xff]
        %v392 = vld [vmem:[#allocation5 + $0x188] sm:$0xff]
        %v393 = vld [vmem:[#allocation5 + $0x190] sm:$0xff]
        %v394 = vld [vmem:[#allocation5 + $0x198] sm:$0xff]
        %v395 = vld [vmem:[#allocation5 + $0x1a0] sm:$0xff]
        %v396 = vld [vmem:[#allocation5 + $0x1a8] sm:$0xff]
        %v397 = vld [vmem:[#allocation5 + $0x1b0] sm:$0xff]
        %v398 = vld [vmem:[#allocation5 + $0x1b8] sm:$0xff]
        %v399 = vld [vmem:[#allocation5 + $0x1c0] sm:$0xff]
        %v400 = vld [vmem:[#allocation5 + $0x1c8] sm:$0xff]
        %v401 = vld [vmem:[#allocation5 + $0x1d0] sm:$0xff]
        %v402 = vld [vmem:[#allocation5 + $0x1d8] sm:$0xff]
        %v403 = vld [vmem:[#allocation5 + $0x1e0] sm:$0xff]
        %v404 = vld [vmem:[#allocation5 + $0x1e8] sm:$0xff]
        %v405 = vld [vmem:[#allocation5 + $0x1f0] sm:$0xff]
        %v406 = vld [vmem:[#allocation5 + $0x1f8] sm:$0xff]
        %v407 = vld [vmem:[#allocation7] sm:$0x3]
        %v409 = vperm.slane %v407, 0
        %v410 = vperm.slane %v407, 1
        %413 = vmatpush.xpose.msra.mxu0 %v373
        %414 = vmatpush.xpose.msra.mxu0 %v371
        %415 = vmatpush.xpose.msra.mxu0 %v369
        %416 = vmatpush.xpose.msra.mxu0 %v367
        %417 = vmatpush.xpose.msra.mxu0 %v365
        %418 = vmatpush.xpose.msra.mxu0 %v363
        %419 = vmatpush.xpose.msra.mxu0 %v361
        %420 = vmatpush.xpose.msra.mxu0 %v359
        %421 = vmatpush.xpose.msra.mxu0 %v357
        %422 = vmatpush.xpose.msra.mxu0 %v355
        %423 = vmatpush.xpose.msra.mxu0 %v353
        %424 = vmatpush.xpose.msra.mxu0 %v351
        %425 = vmatpush.xpose.msra.mxu0 %v349
        %426 = vmatpush.xpose.msra.mxu0 %v347
        %427 = vmatpush.xpose.msra.mxu0 %v345
        %428 = vmatpush.xpose.msra.mxu0 %v343
        %429 = vmatmul.f32.gmra.mxu0 %v341
        %v430 = vpop.f32.mrf.mxu0
        %v431 = vadd.f32 %v409, %v430
        %432 = vdwg.mxu0
        %433 = vmatpush.xpose.msra.mxu0 %v374
        %434 = vmatpush.xpose.msra.mxu0 %v372
        %435 = vmatpush.xpose.msra.mxu0 %v370
        %436 = vmatpush.xpose.msra.mxu0 %v368
        %437 = vmatpush.xpose.msra.mxu0 %v366
        %438 = vmatpush.xpose.msra.mxu0 %v364
        %439 = vmatpush.xpose.msra.mxu0 %v362
        %440 = vmatpush.xpose.msra.mxu0 %v360
        %441 = vmatpush.xpose.msra.mxu0 %v358
        %442 = vmatpush.xpose.msra.mxu0 %v356
        %443 = vmatpush.xpose.msra.mxu0 %v354
        %444 = vmatpush.xpose.msra.mxu0 %v352
        %445 = vmatpush.xpose.msra.mxu0 %v350
        %446 = vmatpush.xpose.msra.mxu0 %v348
        %447 = vmatpush.xpose.msra.mxu0 %v346
        %448 = vmatpush.xpose.msra.mxu0 %v344
        %449 = vmatmul.f32.gmra.mxu0 %v342
        %v450 = vpop.f32.mrf.mxu0
        %v451 = vadd.f32 %v431, %v450
        %452 = vdwg.mxu0
        %453 = vmatpush.xpose.msra.mxu0 %v405
        %454 = vmatpush.xpose.msra.mxu0 %v403
        %455 = vmatpush.xpose.msra.mxu0 %v401
        %456 = vmatpush.xpose.msra.mxu0 %v399
        %457 = vmatpush.xpose.msra.mxu0 %v397
        %458 = vmatpush.xpose.msra.mxu0 %v395
        %459 = vmatpush.xpose.msra.mxu0 %v393
        %460 = vmatpush.xpose.msra.mxu0 %v391
        %461 = vmatpush.xpose.msra.mxu0 %v389
        %462 = vmatpush.xpose.msra.mxu0 %v387
        %463 = vmatpush.xpose.msra.mxu0 %v385
        %464 = vmatpush.xpose.msra.mxu0 %v383
        %465 = vmatpush.xpose.msra.mxu0 %v381
        %466 = vmatpush.xpose.msra.mxu0 %v379
        %467 = vmatpush.xpose.msra.mxu0 %v377
        %468 = vmatpush.xpose.msra.mxu0 %v375
        %469 = vmatmul.f32.gmra.mxu0 %v341
        %v470 = vpop.f32.mrf.mxu0
        %v471 = vadd.f32 %v410, %v470
        %472 = vdwg.mxu0
        %473 = vmatpush.xpose.msra.mxu0 %v406
        %474 = vmatpush.xpose.msra.mxu0 %v404
        %475 = vmatpush.xpose.msra.mxu0 %v402
        %476 = vmatpush.xpose.msra.mxu0 %v400
        %477 = vmatpush.xpose.msra.mxu0 %v398
        %478 = vmatpush.xpose.msra.mxu0 %v396
        %479 = vmatpush.xpose.msra.mxu0 %v394
        %480 = vmatpush.xpose.msra.mxu0 %v392
        %481 = vmatpush.xpose.msra.mxu0 %v390
        %482 = vmatpush.xpose.msra.mxu0 %v388
        %483 = vmatpush.xpose.msra.mxu0 %v386
        %484 = vmatpush.xpose.msra.mxu0 %v384
        %485 = vmatpush.xpose.msra.mxu0 %v382
        %486 = vmatpush.xpose.msra.mxu0 %v380
        %487 = vmatpush.xpose.msra.mxu0 %v378
        %488 = vmatpush.xpose.msra.mxu0 %v376
        %489 = vmatmul.f32.gmra.mxu0 %v342
        %v490 = vpop.f32.mrf.mxu0
        %v491 = vadd.f32 %v471, %v490
        %492 = vdwg.mxu0
        %v493 = vld [vmem:[%s306] sm:$0xff]
        %v494 = vld [vmem:[%s306 + $0x8] sm:$0xff]
        %v495 = vadd.f32 %v451, %v493
        %v496 = vadd.f32 %v491, %v494
        %v497 = vadd.f32 %v495, %v496
        %498 = vadd.xlane.f32.xlu0 %v497
        %v499 = vpop.xlane.xlu0 %498
        %v500 = vmul.f32 %v499, 0.00390625
        %v501 = vmul.f32 %v495, %v495
        %v502 = vmul.f32 %v496, %v496
        %v503 = vadd.f32 %v501, %v502
        %504 = vadd.xlane.f32.xlu0 %v503
        %v505 = vpop.xlane.xlu0 %504
        %v506 = vmul.f32 %v505, 0.00390625
        %v507 = vmul.f32 %v500, %v500
        %v508 = vsub.f32 %v506, %v507
        %v509 = vmax.f32 %v508, 0.0
        %v510 = vsub.f32 %v495, %v500
        %v511 = vsub.f32 %v496, %v500
        %v512 = vadd.f32 %v509, 1e-08
        %v513 = vrsqrt.pop %v512
        %v514 = vmul.f32 %v513, %v512
        %v515 = vmul.f32 %v514, %v513
        %v516 = vmul.f32 0.5, %v515
        %v517 = vsub.f32 1.5, %v516
        %v518 = vmul.f32 %v513, %v517
        %vm519 = vweird.f32 %v512
        %vm520 = vweird.f32 %v513
        %vm521 = vmor %vm519, %vm520
        %v522 = vsel %vm521, %v513, %v518
        %v523 = vmul.f32 %v510, %v522
        %v524 = vmul.f32 %v511, %v522
        %v525 = vld [vmem:[%s4] sm:$0x3]
        %v527 = vperm.slane %v525, 0
        %v528 = vperm.slane %v525, 1
        %v531 = vmul.f32 %v523, %v527
        %v532 = vmul.f32 %v524, %v528
        %v533 = vld [vmem:[%s5] sm:$0x3]
        %v535 = vperm.slane %v533, 0
        %v536 = vperm.slane %v533, 1
        %v539 = vadd.f32 %v531, %v535
        %v540 = vadd.f32 %v532, %v536
        %541 = vst [vmem:[%s340] sm:$0xff] %v539
        %542 = vst [vmem:[%s340 + $0x8] sm:$0xff] %v540
        %s543 = sand.u32 %s171, 1
        %s544 = scalar_lea.sflag [#allocation4], %s543
        %s545 = sand.u32 %s171, 1
        %s546 = smul.addr %s545, 16
        %s547 = scalar_lea.vmem [#allocation10], %s546
        // Predicated region
        $region61: #{tpu_custom_call.1} parent=43 // pred_check
          %p548 = pneg %p181
        $region62: #{tpu_custom_call.1} parent=43 // pred_check_branch
          %550 = sbr.rel (%p548) target = $region64
        $region63: #{tpu_custom_call.1} parent=43 // pred_region
          %552 = vsyncadd %s544, 0
          %s553 = smul.addr %s27, 2
          %s554 = smul.addr %s553, 8
          %s555 = scalar_lea.hbm %s6, %s554
          %s557 = sshll.u32 %s547, 4
          %s558 = int_to_ptr.vmem [resolvable:$true] %s557
          %s559 = sshll.u32 %s555, 4
          %s560 = int_to_ptr.hbm [resolvable:$true] %s559
          %562 = dma.vmem_to_hbm [thread:$0]  %s558, 256, %s560, %s544
        $region64: #{tpu_custom_call.1} parent=43 // pred_fallthru
          _
      $region44: #{tpu_custom_call.1} parent=5 // pred_fallthru
        _
      %p563 = scmp.le.s32.totalorder 2, %s22
      // Predicated region
      $region65: #{tpu_custom_call.1} parent=5 // pred_check
        %p564 = pneg %p563
      $region66: #{tpu_custom_call.1} parent=5 // pred_check_branch
        %566 = sbr.rel (%p564) target = $region68
      $region67: #{tpu_custom_call.1} parent=5 // pred_region
        %s567 = ssub.s32 %s22, 2
        // Predicated region
        $region69: #{tpu_custom_call.1} parent=67 // pred_check
          %p568 = pneg %p187
        $region70: #{tpu_custom_call.1} parent=67 // pred_check_branch
          %570 = sbr.rel (%p568) target = $region72
        $region71: #{tpu_custom_call.1} parent=67 // pred_region
          %s571 = sand.u32 %s172, 1
          %s572 = scalar_lea.sflag [#allocation4], %s571
          %s573 = sand.u32 %s172, 1
          %s574 = smul.addr %s573, 16
          %s575 = scalar_lea.vmem [#allocation10], %s574
          %577 = dma.done %s572, 256
        $region72: #{tpu_custom_call.1} parent=67 // pred_fallthru
          _
      $region68: #{tpu_custom_call.1} parent=5 // pred_fallthru
        _
    $region6: #{tpu_custom_call.1} parent=1 // loop_footer
      %s26 = sadd.s32 1, %s22
    $region7: #{tpu_custom_call.1} parent=1 // loop_footer_branch
      %21 = sbr.rel target = $region3
    $region8: #{tpu_custom_call.1} parent=1 // loop_exit
      _
    %578 = vsyncpa [#allocation3], 1
    %s579 = scalar_lea.sflag [#allocation3], 1
    %580 = vsyncpa %s579, 1
    %581 = vsyncpa [#allocation6], 1
    %582 = vsyncpa [#allocation9], 1
    %s583 = scalar_lea.sflag [#allocation9], 1
    %584 = vsyncpa %s583, 1
    %585 = vsyncpa [#allocation4], 1
    %s586 = scalar_lea.sflag [#allocation4], 1
    %587 = vsyncpa %s586, 1

</llo_original>
